<compile_context>
chip_gen: v5e
topology: v5e:2x2
jax: 0.10.0
libtpu: 0.0.40
codegen_flags: <defaults>
</compile_context>

<pallas_src>
import numpy as np

import jax
import jax.numpy as jnp
from jax import lax
from jax.experimental import pallas as pl
from jax.experimental.pallas import tpu as pltpu

# ----------------------------------------------------------------------------
# Small test config (DecoderBlock(in_planes=8, out_planes=4), 16x16 feature map).
N = 2
CIN = 8            # in_planes
COUT = 4           # out_planes
H = W = 16
SCALE = 2
HO, WO = H * SCALE, W * SCALE
HW = H * W
HALO = W + 1       # flat halo so every 3x3 tap is a static, in-bounds lane slice
MXU_DTYPE = jnp.float32   # set to jnp.bfloat16 on v6e/v7x (loosen tolerance if so)


# ----------------------------------------------------------------------------
# Host-precomputed constants: bilinear (align_corners=True) interpolation matrix
# and the per-tap row-wrap masks for the flattened 3x3 conv.
def _interp_matrix(out_size, in_size):
    """align_corners=True linear interpolation matrix; rows sum to 1."""
    m = np.zeros((out_size, in_size), np.float32)
    if in_size == 1:
        m[:, 0] = 1.0
        return m
    pos = np.arange(out_size, dtype=np.float64) * (in_size - 1) / (out_size - 1)
    lo = np.clip(np.floor(pos).astype(np.int64), 0, in_size - 2)
    frac = (pos - lo).astype(np.float32)
    m[np.arange(out_size), lo] = 1.0 - frac
    m[np.arange(out_size), lo + 1] = frac
    return m


_AH = _interp_matrix(HO, H)                       # (HO, H)
_AW = _interp_matrix(WO, W)                       # (WO, W)
# u_flat = z_flat @ UP_MATRIX, UP_MATRIX[h*W+w, oy*WO+ox] = AH[oy,h]*AW[ox,w]
UP_MATRIX = jnp.asarray(np.kron(_AH, _AW).T)      # (H*W, HO*WO)

_wcoord = np.arange(HW) % W
_wm = np.ones((3, 1, HW), np.float32)
_wm[0, 0, _wcoord == 0] = 0.0        # tap shift ow = -1: kill lanes that wrapped a row
_wm[2, 0, _wcoord == W - 1] = 0.0    # tap shift ow = +1
WRAP_MASK = jnp.asarray(_wm)                      # (3, 1, HW)


# ----------------------------------------------------------------------------
# The fused kernel: one batch sample per grid step, everything in VMEM.
def decoder_block_kernel(x_ref, w3_ref, b3_ref, w1_ref, b1_ref,
                         wmask_ref, up_ref, out_ref):
    xp = x_ref[...]                                    # (CIN, HW + 2*HALO)

    # --- conv3x3 (pad=1, bias folded from BN) + ReLU: one im2col slab matmul ---
    patches = []
    for kh in range(3):
        for kw in range(3):
            base = HALO + (kh - 1) * W + (kw - 1)      # static lane offset
            p = xp[:, base:base + HW]                  # (CIN, HW)
            if kw != 1:                                # mask lanes that wrapped a row
                p = p * wmask_ref[kw]
            patches.append(p)
    im2col = jnp.concatenate(patches, axis=0)          # (9*CIN, HW), contraction dim
    y = jnp.dot(w3_ref[...].astype(MXU_DTYPE), im2col.astype(MXU_DTYPE),
                preferred_element_type=jnp.float32)
    y = jnp.maximum(y + b3_ref[...], 0.0)              # (CIN, HW)

    # --- 1x1 conv + folded BN, commuted ahead of the upsample ------------------
    z = jnp.dot(w1_ref[...].astype(MXU_DTYPE), y.astype(MXU_DTYPE),
                preferred_element_type=jnp.float32) + b1_ref[...]   # (COUT, HW)

    # --- bilinear x2 (align_corners=True) as one lane-dense matmul + ReLU ------
    u = jnp.dot(z.astype(MXU_DTYPE), up_ref[...].astype(MXU_DTYPE),
                preferred_element_type=jnp.float32)    # (COUT, HO*WO)
    out_ref[...] = jnp.maximum(u, 0.0)


def decoder_block_forward(x, p):
    eps = 1e-5
    # Fold eval-mode BatchNorm into the conv weights / biases.
    s3 = p['bn3_gamma'] / jnp.sqrt(p['bn3_var'] + eps)
    w3f = p['w_conv3'] * s3[:, None, None, None]                     # (CIN, CIN, 3, 3)
    w3cat = jnp.transpose(w3f, (0, 2, 3, 1)).reshape(CIN, 9 * CIN)   # taps -> K dim
    b3 = (p['bn3_beta'] - p['bn3_mean'] * s3).reshape(CIN, 1)

    s1 = p['bn1_gamma'] / jnp.sqrt(p['bn1_var'] + eps)
    w1f = p['w_conv1'][:, :, 0, 0] * s1[:, None]                     # (COUT, CIN)
    b1 = (p['bn1_beta'] - p['bn1_mean'] * s1).reshape(COUT, 1)

    # Flatten spatial dims (free, contiguous view) + tiny flat halo so all nine
    # 3x3 taps become static in-bounds lane slices inside the kernel.
    xflat = x.reshape(N, CIN, HW)
    xpad = jnp.pad(xflat, ((0, 0), (0, 0), (HALO, HALO)))

    out_flat = pl.pallas_call(
        decoder_block_kernel,
        grid=(N,),
        in_specs=[
            pl.BlockSpec((None, CIN, HW + 2 * HALO), lambda n: (n, 0, 0)),
            pl.BlockSpec((CIN, 9 * CIN), lambda n: (0, 0)),
            pl.BlockSpec((CIN, 1), lambda n: (0, 0)),
            pl.BlockSpec((COUT, CIN), lambda n: (0, 0)),
            pl.BlockSpec((COUT, 1), lambda n: (0, 0)),
            pl.BlockSpec((3, 1, HW), lambda n: (0, 0, 0)),
            pl.BlockSpec((HW, HO * WO), lambda n: (0, 0)),
        ],
        out_specs=pl.BlockSpec((None, COUT, HO * WO), lambda n: (n, 0, 0)),
        out_shape=jax.ShapeDtypeStruct((N, COUT, HO * WO), jnp.float32),
        compiler_params=pltpu.CompilerParams(
            dimension_semantics=("parallel",)),
    )(xpad, w3cat, b3, w1f, b1, WRAP_MASK, UP_MATRIX)

    return out_flat.reshape(N, COUT, HO, WO)


# ----------------------------------------------------------------------------
# Pure-JAX reference (faithful to the PyTorch order: conv3x3 -> BN -> ReLU ->
# bilinear upsample (align_corners=True) -> conv1x1 -> BN -> ReLU).
def _bn_eval(x, gamma, beta, mean, var, eps=1e-5):
    s = gamma / jnp.sqrt(var + eps)
    return x * s[None, :, None, None] + (beta - mean * s)[None, :, None, None]


def _upsample_bilinear_ac(x, scale):
    n, c, h, w = x.shape
    ho, wo = h * scale, w * scale

    def coords(o, i):
        pos = jnp.arange(o, dtype=jnp.float32) * ((i - 1) / (o - 1))
        lo = jnp.clip(jnp.floor(pos).astype(jnp.int32), 0, i - 2)
        return pos - lo.astype(jnp.float32), lo

    fy, y0 = coords(ho, h)
    fx, x0 = coords(wo, w)
    top = (x[:, :, y0, :] * (1.0 - fy)[None, None, :, None]
           + x[:, :, y0 + 1, :] * fy[None, None, :, None])
    out = (top[:, :, :, x0] * (1.0 - fx)[None, None, None, :]
           + top[:, :, :, x0 + 1] * fx[None, None, None, :])
    return out


def reference_forward(x, p):
    y = lax.conv_general_dilated(x, p['w_conv3'], (1, 1), [(1, 1), (1, 1)],
                                 dimension_numbers=('NCHW', 'OIHW', 'NCHW'))
    y = jnp.maximum(_bn_eval(y, p['bn3_gamma'], p['bn3_beta'],
                             p['bn3_mean'], p['bn3_var']), 0.0)
    y = _upsample_bilinear_ac(y, SCALE)
    y = lax.conv_general_dilated(y, p['w_conv1'], (1, 1), [(0, 0), (0, 0)],
                                 dimension_numbers=('NCHW', 'OIHW', 'NCHW'))
    y = jnp.maximum(_bn_eval(y, p['bn1_gamma'], p['bn1_beta'],
                             p['bn1_mean'], p['bn1_var']), 0.0)
    return y


# ----------------------------------------------------------------------------
def init_params(key):
    ks = jax.random.split(key, 10)
    nrm = lambda k, shape, s: s * jax.random.normal(k, shape, jnp.float32)
    return {
        'w_conv3':   nrm(ks[0], (CIN, CIN, 3, 3), 0.1),     # Conv2d(CIN, CIN, 3, pad=1)
        'bn3_gamma': 1.0 + 0.02 * jax.random.normal(ks[1], (CIN,), jnp.float32),
        'bn3_beta':  nrm(ks[2], (CIN,), 0.05),
        'bn3_mean':  nrm(ks[3], (CIN,), 0.1),
        'bn3_var':   0.5 + jax.random.uniform(ks[4], (CIN,), jnp.float32),
        'w_conv1':   nrm(ks[5], (COUT, CIN, 1, 1), 0.1),     # Conv2d(CIN, COUT, 1)
        'bn1_gamma': 1.0 + 0.02 * jax.random.normal(ks[6], (COUT,), jnp.float32),
        'bn1_beta':  nrm(ks[7], (COUT,), 0.05),
        'bn1_mean':  nrm(ks[8], (COUT,), 0.1),
        'bn1_var':   0.5 + jax.random.uniform(ks[9], (COUT,), jnp.float32),
    }


if __name__ == "__main__":
    key = jax.random.PRNGKey(0)
    kx, kp = jax.random.split(key)
    x = jax.random.normal(kx, (N, CIN, H, W), jnp.float32)
    params = init_params(kp)

    fwd = jax.jit(decoder_block_forward)
    out = fwd(x, params)
    jax.block_until_ready(out)

    ref = reference_forward(x, params)
    if not bool(jnp.allclose(out, ref, atol=5e-4, rtol=5e-4)):
        raise RuntimeError(
            f"mismatch vs reference: max abs diff = "
            f"{float(jnp.max(jnp.abs(out - ref)))}")
    print("KERNEL_OK")
</pallas_src>

<mosaic_0001>
module attributes {stable_mosaic.version = 11 : i64} {
  func.func @decoder_block_kernel(%arg0: i32, %arg1: memref<1x8x290xf32, #tpu.memory_space<vmem>>, %arg2: memref<8x72xf32, #tpu.memory_space<vmem>>, %arg3: memref<8x1xf32, #tpu.memory_space<vmem>>, %arg4: memref<4x8xf32, #tpu.memory_space<vmem>>, %arg5: memref<4x1xf32, #tpu.memory_space<vmem>>, %arg6: memref<3x1x256xf32, #tpu.memory_space<vmem>>, %arg7: memref<256x1024xf32, #tpu.memory_space<vmem>>, %arg8: memref<1x4x1024xf32, #tpu.memory_space<vmem>>) attributes {dimension_semantics = [#tpu.dimension_semantics<parallel>], iteration_bounds = array<i64: 2>, scalar_prefetch = 0 : i64, scratch_operands = 0 : i64, tpu.core_type = #tpu.core_type<tc>, window_params = [{transform_indices = @transform_0, window_bounds = array<i64: 1, 8, 290>}, {pipeline_mode = #tpu.pipeline_mode<synchronous>, transform_indices = @transform_1, window_bounds = array<i64: 8, 72>}, {pipeline_mode = #tpu.pipeline_mode<synchronous>, transform_indices = @transform_2, window_bounds = array<i64: 8, 1>}, {pipeline_mode = #tpu.pipeline_mode<synchronous>, transform_indices = @transform_3, window_bounds = array<i64: 4, 8>}, {pipeline_mode = #tpu.pipeline_mode<synchronous>, transform_indices = @transform_4, window_bounds = array<i64: 4, 1>}, {pipeline_mode = #tpu.pipeline_mode<synchronous>, transform_indices = @transform_5, window_bounds = array<i64: 3, 1, 256>}, {pipeline_mode = #tpu.pipeline_mode<synchronous>, transform_indices = @transform_6, window_bounds = array<i64: 256, 1024>}, {transform_indices = @transform_7, window_bounds = array<i64: 1, 4, 1024>}]} {
    %c0 = arith.constant 0 : index
    %c0_0 = arith.constant 0 : index
    %c0_1 = arith.constant 0 : index
    %0 = vector.load %arg1[%c0, %c0_0, %c0_1] : memref<1x8x290xf32, #tpu.memory_space<vmem>>, vector<1x8x290xf32>
    %1 = vector.shape_cast %0 : vector<1x8x290xf32> to vector<8x290xf32>
    %2 = vector.extract_strided_slice %1 {offsets = [0, 0], sizes = [8, 256], strides = [1, 1]} : vector<8x290xf32> to vector<8x256xf32>
    %c0_2 = arith.constant 0 : index
    %c0_3 = arith.constant 0 : index
    %c0_4 = arith.constant 0 : index
    %3 = vector.load %arg6[%c0_2, %c0_3, %c0_4] : memref<3x1x256xf32, #tpu.memory_space<vmem>>, vector<1x1x256xf32>
    %4 = vector.shape_cast %3 : vector<1x1x256xf32> to vector<1x256xf32>
    %5 = vector.broadcast %4 : vector<1x256xf32> to vector<8x256xf32>
    %6 = arith.mulf %2, %5 : vector<8x256xf32>
    %7 = vector.extract_strided_slice %1 {offsets = [0, 1], sizes = [8, 256], strides = [1, 1]} : vector<8x290xf32> to vector<8x256xf32>
    %8 = vector.extract_strided_slice %1 {offsets = [0, 2], sizes = [8, 256], strides = [1, 1]} : vector<8x290xf32> to vector<8x256xf32>
    %c2 = arith.constant 2 : index
    %c0_5 = arith.constant 0 : index
    %c0_6 = arith.constant 0 : index
    %9 = vector.load %arg6[%c2, %c0_5, %c0_6] : memref<3x1x256xf32, #tpu.memory_space<vmem>>, vector<1x1x256xf32>
    %10 = vector.shape_cast %9 : vector<1x1x256xf32> to vector<1x256xf32>
    %11 = vector.broadcast %10 : vector<1x256xf32> to vector<8x256xf32>
    %12 = arith.mulf %8, %11 : vector<8x256xf32>
    %13 = vector.extract_strided_slice %1 {offsets = [0, 16], sizes = [8, 256], strides = [1, 1]} : vector<8x290xf32> to vector<8x256xf32>
    %c0_7 = arith.constant 0 : index
    %c0_8 = arith.constant 0 : index
    %c0_9 = arith.constant 0 : index
    %14 = vector.load %arg6[%c0_7, %c0_8, %c0_9] : memref<3x1x256xf32, #tpu.memory_space<vmem>>, vector<1x1x256xf32>
    %15 = vector.shape_cast %14 : vector<1x1x256xf32> to vector<1x256xf32>
    %16 = vector.broadcast %15 : vector<1x256xf32> to vector<8x256xf32>
    %17 = arith.mulf %13, %16 : vector<8x256xf32>
    %18 = vector.extract_strided_slice %1 {offsets = [0, 17], sizes = [8, 256], strides = [1, 1]} : vector<8x290xf32> to vector<8x256xf32>
    %19 = vector.extract_strided_slice %1 {offsets = [0, 18], sizes = [8, 256], strides = [1, 1]} : vector<8x290xf32> to vector<8x256xf32>
    %c2_10 = arith.constant 2 : index
    %c0_11 = arith.constant 0 : index
    %c0_12 = arith.constant 0 : index
    %20 = vector.load %arg6[%c2_10, %c0_11, %c0_12] : memref<3x1x256xf32, #tpu.memory_space<vmem>>, vector<1x1x256xf32>
    %21 = vector.shape_cast %20 : vector<1x1x256xf32> to vector<1x256xf32>
    %22 = vector.broadcast %21 : vector<1x256xf32> to vector<8x256xf32>
    %23 = arith.mulf %19, %22 : vector<8x256xf32>
    %24 = vector.extract_strided_slice %1 {offsets = [0, 32], sizes = [8, 256], strides = [1, 1]} : vector<8x290xf32> to vector<8x256xf32>
    %c0_13 = arith.constant 0 : index
    %c0_14 = arith.constant 0 : index
    %c0_15 = arith.constant 0 : index
    %25 = vector.load %arg6[%c0_13, %c0_14, %c0_15] : memref<3x1x256xf32, #tpu.memory_space<vmem>>, vector<1x1x256xf32>
    %26 = vector.shape_cast %25 : vector<1x1x256xf32> to vector<1x256xf32>
    %27 = vector.broadcast %26 : vector<1x256xf32> to vector<8x256xf32>
    %28 = arith.mulf %24, %27 : vector<8x256xf32>
    %29 = vector.extract_strided_slice %1 {offsets = [0, 33], sizes = [8, 256], strides = [1, 1]} : vector<8x290xf32> to vector<8x256xf32>
    %30 = vector.extract_strided_slice %1 {offsets = [0, 34], sizes = [8, 256], strides = [1, 1]} : vector<8x290xf32> to vector<8x256xf32>
    %c2_16 = arith.constant 2 : index
    %c0_17 = arith.constant 0 : index
    %c0_18 = arith.constant 0 : index
    %31 = vector.load %arg6[%c2_16, %c0_17, %c0_18] : memref<3x1x256xf32, #tpu.memory_space<vmem>>, vector<1x1x256xf32>
    %32 = vector.shape_cast %31 : vector<1x1x256xf32> to vector<1x256xf32>
    %33 = vector.broadcast %32 : vector<1x256xf32> to vector<8x256xf32>
    %34 = arith.mulf %30, %33 : vector<8x256xf32>
    %35 = tpu.concatenate %6, %7, %12, %17, %18, %23, %28, %29, %34 in 0 : vector<8x256xf32>, vector<8x256xf32>, vector<8x256xf32>, vector<8x256xf32>, vector<8x256xf32>, vector<8x256xf32>, vector<8x256xf32>, vector<8x256xf32>, vector<8x256xf32> -> vector<72x256xf32>
    %c0_19 = arith.constant 0 : index
    %c0_20 = arith.constant 0 : index
    %36 = vector.load %arg2[%c0_19, %c0_20] : memref<8x72xf32, #tpu.memory_space<vmem>>, vector<8x72xf32>
    %cst = arith.constant dense<0.000000e+00> : vector<8x256xf32>
    %37 = tpu.matmul %36, %35, %cst {dimension_numbers = #tpu.dot_dimension_numbers<[1], [0], [0], [1], [0, 0, 1, 1], [], []>} : vector<8x72xf32>, vector<72x256xf32>, vector<8x256xf32> -> vector<8x256xf32>
    %c0_21 = arith.constant 0 : index
    %c0_22 = arith.constant 0 : index
    %38 = vector.load %arg3[%c0_21, %c0_22] : memref<8x1xf32, #tpu.memory_space<vmem>>, vector<8x1xf32>
    %39 = vector.broadcast %38 : vector<8x1xf32> to vector<8x256xf32>
    %40 = arith.addf %37, %39 : vector<8x256xf32>
    %cst_23 = arith.constant 0.000000e+00 : f32
    %41 = vector.broadcast %cst_23 : f32 to vector<8x256xf32>
    %42 = arith.maximumf %40, %41 : vector<8x256xf32>
    %c0_24 = arith.constant 0 : index
    %c0_25 = arith.constant 0 : index
    %43 = vector.load %arg4[%c0_24, %c0_25] : memref<4x8xf32, #tpu.memory_space<vmem>>, vector<4x8xf32>
    %cst_26 = arith.constant dense<0.000000e+00> : vector<4x256xf32>
    %44 = tpu.matmul %43, %42, %cst_26 {dimension_numbers = #tpu.dot_dimension_numbers<[1], [0], [0], [1], [0, 0, 1, 1], [], []>} : vector<4x8xf32>, vector<8x256xf32>, vector<4x256xf32> -> vector<4x256xf32>
    %c0_27 = arith.constant 0 : index
    %c0_28 = arith.constant 0 : index
    %45 = vector.load %arg5[%c0_27, %c0_28] : memref<4x1xf32, #tpu.memory_space<vmem>>, vector<4x1xf32>
    %46 = vector.broadcast %45 : vector<4x1xf32> to vector<4x256xf32>
    %47 = arith.addf %44, %46 : vector<4x256xf32>
    %c0_29 = arith.constant 0 : index
    %c0_30 = arith.constant 0 : index
    %48 = vector.load %arg7[%c0_29, %c0_30] : memref<256x1024xf32, #tpu.memory_space<vmem>>, vector<256x1024xf32>
    %cst_31 = arith.constant dense<0.000000e+00> : vector<4x1024xf32>
    %49 = tpu.matmul %47, %48, %cst_31 {dimension_numbers = #tpu.dot_dimension_numbers<[1], [0], [0], [1], [0, 0, 1, 1], [], []>} : vector<4x256xf32>, vector<256x1024xf32>, vector<4x1024xf32> -> vector<4x1024xf32>
    %cst_32 = arith.constant 0.000000e+00 : f32
    %50 = vector.broadcast %cst_32 : f32 to vector<4x1024xf32>
    %51 = arith.maximumf %49, %50 : vector<4x1024xf32>
    %c0_33 = arith.constant 0 : index
    %c0_34 = arith.constant 0 : index
    %c0_35 = arith.constant 0 : index
    %52 = vector.load %arg8[%c0_33, %c0_34, %c0_35] : memref<1x4x1024xf32, #tpu.memory_space<vmem>>, vector<1x4x1024xf32>
    %53 = vector.shape_cast %52 : vector<1x4x1024xf32> to vector<4x1024xf32>
    %54 = vector.shape_cast %51 : vector<4x1024xf32> to vector<1x4x1024xf32>
    tpu.vector_store %arg8[%c0_33, %c0_34, %c0_35], %54 {strides = array<i32>} : memref<1x4x1024xf32, #tpu.memory_space<vmem>>, vector<1x4x1024xf32>,
    return
  }
  func.func @transform_0(%arg0: i32) -> (i32, i32, i32) {
    %c0_i32 = arith.constant 0 : i32
    %c0_i32_0 = arith.constant 0 : i32
    %c0_i32_1 = arith.constant 0 : i32
    return %arg0, %c0_i32, %c0_i32_0 : i32, i32, i32
  }
  func.func @transform_1(%arg0: i32) -> (i32, i32) {
    %c0_i32 = arith.constant 0 : i32
    %c0_i32_0 = arith.constant 0 : i32
    %c0_i32_1 = arith.constant 0 : i32
    return %c0_i32, %c0_i32_0 : i32, i32
  }
  func.func @transform_2(%arg0: i32) -> (i32, i32) {
    %c0_i32 = arith.constant 0 : i32
    %c0_i32_0 = arith.constant 0 : i32
    %c0_i32_1 = arith.constant 0 : i32
    return %c0_i32, %c0_i32_0 : i32, i32
  }
  func.func @transform_3(%arg0: i32) -> (i32, i32) {
    %c0_i32 = arith.constant 0 : i32
    %c0_i32_0 = arith.constant 0 : i32
    %c0_i32_1 = arith.constant 0 : i32
    return %c0_i32, %c0_i32_0 : i32, i32
  }
  func.func @transform_4(%arg0: i32) -> (i32, i32) {
    %c0_i32 = arith.constant 0 : i32
    %c0_i32_0 = arith.constant 0 : i32
    %c0_i32_1 = arith.constant 0 : i32
    return %c0_i32, %c0_i32_0 : i32, i32
  }
  func.func @transform_5(%arg0: i32) -> (i32, i32, i32) {
    %c0_i32 = arith.constant 0 : i32
    %c0_i32_0 = arith.constant 0 : i32
    %c0_i32_1 = arith.constant 0 : i32
    %c0_i32_2 = arith.constant 0 : i32
    return %c0_i32, %c0_i32_0, %c0_i32_1 : i32, i32, i32
  }
  func.func @transform_6(%arg0: i32) -> (i32, i32) {
    %c0_i32 = arith.constant 0 : i32
    %c0_i32_0 = arith.constant 0 : i32
    %c0_i32_1 = arith.constant 0 : i32
    return %c0_i32, %c0_i32_0 : i32, i32
  }
  func.func @transform_7(%arg0: i32) -> (i32, i32, i32) {
    %c0_i32 = arith.constant 0 : i32
    %c0_i32_0 = arith.constant 0 : i32
    %c0_i32_1 = arith.constant 0 : i32
    return %arg0, %c0_i32, %c0_i32_0 : i32, i32, i32
  }
}

</mosaic_0001>

<llo_original>
// kernel: decoder_block_forward.1
$region0: #{decoder_block_forward.1}
  #allocation0 [shape = 'u32[]', space=smem, size = 0x4, offset = 0x4, fixed_abs, tag = 'smem constant byte address 0x4 - core index']
  #allocation1 [shape = 'u32[72,128]{1,0:T(1,128)}', space=vmem, size = 0x9000, scoped, tag = 'internal scratch']
  %s0 = inlined_call_operand.vmem [shape: f32[2,8,290], index: 0, kind: input, shape index: {}]
  %s1 = inlined_call_operand.vmem [shape: f32[8,72], index: 1, kind: input, shape index: {}]
  %s2 = inlined_call_operand.vmem [shape: f32[8,1], index: 2, kind: input, shape index: {}]
  %s3 = inlined_call_operand.vmem [shape: f32[4,8], index: 3, kind: input, shape index: {}]
  %s4 = inlined_call_operand.vmem [shape: f32[4,1], index: 4, kind: input, shape index: {}]
  %s5 = inlined_call_operand.vmem [shape: f32[3,1,256], index: 5, kind: input, shape index: {}]
  %s6 = inlined_call_operand.hbm [shape: f32[256,1024], index: 6, kind: input, shape index: {}]
  %s7 = inlined_call_operand.vmem [shape: f32[2,4,1024], index: 7, kind: output, shape index: {}]
  %s8 = sld [smem:[#allocation0]]
  $region65: #{decoder_block_forward.1} parent=0
    _
  %s10 = ssub.s32 1, %s8
  %s11 = scalar_select 0, %s10, %s8
  $region1: #{decoder_block_forward.1} parent=0
    #allocation2 [shape = 'u8[1048576]{0}', space=vmem, size = 0x100000, scoped, tag = 'input window, operand 6, single buffered']
    #allocation3 [shape = 's32[2]{0}', space=sflag, size = 0x8, scoped, tag = 'scoped memory for decoder_block_forward.1']
    %12 = vsyncpa [#allocation3], 0
    loop: start=0, step=1, limit=4
    $region2: #{decoder_block_forward.1} parent=1 // loop_pre_header
      _
    $region3: #{decoder_block_forward.1} parent=1 // loop_header
      %s14 = sphi 0, %s18
      %p15 = scmp.ge.s32.totalorder %s14, 4
      %s24 = sphi 0, %s26
      %s27 = sphi 0, %s24
      %s28 = sphi 0, %s27
      %s44 = sphi 0, %s28
      %s48 = sphi 0, %s48
      %s50 = sphi 0, %s48
      %s51 = sphi 0, %s50
      %s65 = sphi 0, %s51
      %s69 = sphi 0, %s69
      %s71 = sphi 0, %s69
      %s72 = sphi 0, %s71
      %s86 = sphi 0, %s72
      %s90 = sphi 0, %s90
      %s92 = sphi 0, %s90
      %s93 = sphi 0, %s92
      %s107 = sphi 0, %s93
      %s111 = sphi 0, %s111
      %s113 = sphi 0, %s111
      %s114 = sphi 0, %s113
      %s128 = sphi 0, %s114
      %s132 = sphi 0, %s132
      %s134 = sphi 0, %s132
      %s135 = sphi 0, %s134
      %s149 = sphi 0, %s135
      %s153 = sphi 0, %s153
      %s155 = sphi 0, %s153
      %s156 = sphi 0, %s155
      %s170 = sphi 0, %s156
      %s176 = sphi 0, %s178
      %s179 = sphi 0, %s176
      %s180 = sphi 0, %s179
      %s196 = sphi 0, %s180
    $region4: #{decoder_block_forward.1} parent=1 // loop_header_branch
      %17 = sbr.rel (%p15) target = $region8
    $region5: #{decoder_block_forward.1} parent=1 // loop_body
      %s19 = ssub.s32 %s14, 1
      %s20 = ssub.s32 %s14, 2
      %s21 = sadd.s32 %s14, 1
      %s22 = ssub.s32 %s14, %s21
      %p23 = scmp.eq.s32.totalorder %s22, 0
      %s25 = sadd.s32 %s24, 1
      %s26 = scalar_select %p23, %s24, %s25
      %p29 = pneg %p23
      %p30 = scmp.eq.s32.totalorder %s14, 1
      %p31 = por %p29, %p30
      %p32 = scmp.ne.s32.totalorder %s24, %s27
      %p33 = scmp.eq.s32.totalorder %s14, 0
      %p34 = por %p32, %p33
      %p35 = scmp.ne.s32.totalorder %s24, %s27
      %p36 = scmp.eq.s32.totalorder %s19, 1
      %p37 = por %p35, %p36
      %p38 = scmp.ne.s32.totalorder %s27, %s28
      %p39 = scmp.eq.s32.totalorder %s19, 0
      %p40 = por %p38, %p39
      %p41 = scmp.ne.s32.totalorder %s27, %s28
      %p42 = scmp.eq.s32.totalorder %s20, 1
      %p43 = por %p41, %p42
      %p45 = scmp.ne.s32.totalorder %s28, %s44
      %p46 = scmp.eq.s32.totalorder %s20, 0
      %p47 = por %p45, %p46
      %s49 = sadd.s32 %s48, 1
      %p52 = scmp.eq.s32.totalorder %s14, 1
      %p53 = scmp.ne.s32.totalorder %s48, %s50
      %p54 = scmp.eq.s32.totalorder %s14, 0
      %p55 = por %p53, %p54
      %p56 = scmp.ne.s32.totalorder %s48, %s50
      %p57 = scmp.eq.s32.totalorder %s19, 1
      %p58 = por %p56, %p57
      %p59 = scmp.ne.s32.totalorder %s50, %s51
      %p60 = scmp.eq.s32.totalorder %s19, 0
      %p61 = por %p59, %p60
      %p62 = scmp.ne.s32.totalorder %s50, %s51
      %p63 = scmp.eq.s32.totalorder %s20, 1
      %p64 = por %p62, %p63
      %p66 = scmp.ne.s32.totalorder %s51, %s65
      %p67 = scmp.eq.s32.totalorder %s20, 0
      %p68 = por %p66, %p67
      %s70 = sadd.s32 %s69, 1
      %p73 = scmp.eq.s32.totalorder %s14, 1
      %p74 = scmp.ne.s32.totalorder %s69, %s71
      %p75 = scmp.eq.s32.totalorder %s14, 0
      %p76 = por %p74, %p75
      %p77 = scmp.ne.s32.totalorder %s69, %s71
      %p78 = scmp.eq.s32.totalorder %s19, 1
      %p79 = por %p77, %p78
      %p80 = scmp.ne.s32.totalorder %s71, %s72
      %p81 = scmp.eq.s32.totalorder %s19, 0
      %p82 = por %p80, %p81
      %p83 = scmp.ne.s32.totalorder %s71, %s72
      %p84 = scmp.eq.s32.totalorder %s20, 1
      %p85 = por %p83, %p84
      %p87 = scmp.ne.s32.totalorder %s72, %s86
      %p88 = scmp.eq.s32.totalorder %s20, 0
      %p89 = por %p87, %p88
      %s91 = sadd.s32 %s90, 1
      %p94 = scmp.eq.s32.totalorder %s14, 1
      %p95 = scmp.ne.s32.totalorder %s90, %s92
      %p96 = scmp.eq.s32.totalorder %s14, 0
      %p97 = por %p95, %p96
      %p98 = scmp.ne.s32.totalorder %s90, %s92
      %p99 = scmp.eq.s32.totalorder %s19, 1
      %p100 = por %p98, %p99
      %p101 = scmp.ne.s32.totalorder %s92, %s93
      %p102 = scmp.eq.s32.totalorder %s19, 0
      %p103 = por %p101, %p102
      %p104 = scmp.ne.s32.totalorder %s92, %s93
      %p105 = scmp.eq.s32.totalorder %s20, 1
      %p106 = por %p104, %p105
      %p108 = scmp.ne.s32.totalorder %s93, %s107
      %p109 = scmp.eq.s32.totalorder %s20, 0
      %p110 = por %p108, %p109
      %s112 = sadd.s32 %s111, 1
      %p115 = scmp.eq.s32.totalorder %s14, 1
      %p116 = scmp.ne.s32.totalorder %s111, %s113
      %p117 = scmp.eq.s32.totalorder %s14, 0
      %p118 = por %p116, %p117
      %p119 = scmp.ne.s32.totalorder %s111, %s113
      %p120 = scmp.eq.s32.totalorder %s19, 1
      %p121 = por %p119, %p120
      %p122 = scmp.ne.s32.totalorder %s113, %s114
      %p123 = scmp.eq.s32.totalorder %s19, 0
      %p124 = por %p122, %p123
      %p125 = scmp.ne.s32.totalorder %s113, %s114
      %p126 = scmp.eq.s32.totalorder %s20, 1
      %p127 = por %p125, %p126
      %p129 = scmp.ne.s32.totalorder %s114, %s128
      %p130 = scmp.eq.s32.totalorder %s20, 0
      %p131 = por %p129, %p130
      %s133 = sadd.s32 %s132, 1
      %p136 = scmp.eq.s32.totalorder %s14, 1
      %p137 = scmp.ne.s32.totalorder %s132, %s134
      %p138 = scmp.eq.s32.totalorder %s14, 0
      %p139 = por %p137, %p138
      %p140 = scmp.ne.s32.totalorder %s132, %s134
      %p141 = scmp.eq.s32.totalorder %s19, 1
      %p142 = por %p140, %p141
      %p143 = scmp.ne.s32.totalorder %s134, %s135
      %p144 = scmp.eq.s32.totalorder %s19, 0
      %p145 = por %p143, %p144
      %p146 = scmp.ne.s32.totalorder %s134, %s135
      %p147 = scmp.eq.s32.totalorder %s20, 1
      %p148 = por %p146, %p147
      %p150 = scmp.ne.s32.totalorder %s135, %s149
      %p151 = scmp.eq.s32.totalorder %s20, 0
      %p152 = por %p150, %p151
      %s154 = sadd.s32 %s153, 1
      %p157 = scmp.eq.s32.totalorder %s14, 1
      %p158 = scmp.ne.s32.totalorder %s153, %s155
      %p159 = scmp.eq.s32.totalorder %s14, 0
      %p160 = por %p158, %p159
      %p161 = scmp.ne.s32.totalorder %s153, %s155
      %p162 = scmp.eq.s32.totalorder %s19, 1
      %p163 = por %p161, %p162
      %p164 = scmp.ne.s32.totalorder %s155, %s156
      %p165 = scmp.eq.s32.totalorder %s19, 0
      %p166 = por %p164, %p165
      %p167 = scmp.ne.s32.totalorder %s155, %s156
      %p168 = scmp.eq.s32.totalorder %s20, 1
      %p169 = por %p167, %p168
      %p171 = scmp.ne.s32.totalorder %s156, %s170
      %p172 = scmp.eq.s32.totalorder %s20, 0
      %p173 = por %p171, %p172
      %s174 = ssub.s32 %s14, %s21
      %p175 = scmp.eq.s32.totalorder %s174, 0
      %s177 = sadd.s32 %s176, 1
      %s178 = scalar_select %p175, %s176, %s177
      %p181 = pneg %p175
      %p182 = scmp.eq.s32.totalorder %s14, 1
      %p183 = por %p181, %p182
      %p184 = scmp.ne.s32.totalorder %s176, %s179
      %p185 = scmp.eq.s32.totalorder %s14, 0
      %p186 = por %p184, %p185
      %p187 = scmp.ne.s32.totalorder %s176, %s179
      %p188 = scmp.eq.s32.totalorder %s19, 1
      %p189 = por %p187, %p188
      %p190 = scmp.ne.s32.totalorder %s179, %s180
      %p191 = scmp.eq.s32.totalorder %s19, 0
      %p192 = por %p190, %p191
      %p193 = scmp.ne.s32.totalorder %s179, %s180
      %p194 = scmp.eq.s32.totalorder %s20, 1
      %p195 = por %p193, %p194
      %p197 = scmp.ne.s32.totalorder %s180, %s196
      %p198 = scmp.eq.s32.totalorder %s20, 0
      %p199 = por %p197, %p198
      %p200 = scmp.le.s32.totalorder 1, %s14
      %p201 = scmp.lt.s32.totalorder %s14, 3
      %p202 = pnand %p200, %p201
      %p203 = pneg %p202
      // Predicated region
      $region9: #{decoder_block_forward.1} parent=5 // pred_check
        _
      $region10: #{decoder_block_forward.1} parent=5 // pred_check_branch
        %205 = sbr.rel (%p202) target = $region12
      $region11: #{decoder_block_forward.1} parent=5 // pred_region
        %s206 = ssub.s32 %s14, 1
        // Predicated region
        $region13: #{decoder_block_forward.1} parent=11 // pred_check
          %p207 = pneg %p61
        $region14: #{decoder_block_forward.1} parent=11 // pred_check_branch
          %209 = sbr.rel (%p207) target = $region16
        $region15: #{decoder_block_forward.1} parent=11 // pred_region
          _
        $region16: #{decoder_block_forward.1} parent=11 // pred_fallthru
          _
        // Predicated region
        $region17: #{decoder_block_forward.1} parent=11 // pred_check
          %p210 = pneg %p82
        $region18: #{decoder_block_forward.1} parent=11 // pred_check_branch
          %212 = sbr.rel (%p210) target = $region20
        $region19: #{decoder_block_forward.1} parent=11 // pred_region
          _
        $region20: #{decoder_block_forward.1} parent=11 // pred_fallthru
          _
        // Predicated region
        $region21: #{decoder_block_forward.1} parent=11 // pred_check
          %p213 = pneg %p103
        $region22: #{decoder_block_forward.1} parent=11 // pred_check_branch
          %215 = sbr.rel (%p213) target = $region24
        $region23: #{decoder_block_forward.1} parent=11 // pred_region
          _
        $region24: #{decoder_block_forward.1} parent=11 // pred_fallthru
          _
        // Predicated region
        $region25: #{decoder_block_forward.1} parent=11 // pred_check
          %p216 = pneg %p124
        $region26: #{decoder_block_forward.1} parent=11 // pred_check_branch
          %218 = sbr.rel (%p216) target = $region28
        $region27: #{decoder_block_forward.1} parent=11 // pred_region
          _
        $region28: #{decoder_block_forward.1} parent=11 // pred_fallthru
          _
        // Predicated region
        $region29: #{decoder_block_forward.1} parent=11 // pred_check
          %p219 = pneg %p145
        $region30: #{decoder_block_forward.1} parent=11 // pred_check_branch
          %221 = sbr.rel (%p219) target = $region32
        $region31: #{decoder_block_forward.1} parent=11 // pred_region
          _
        $region32: #{decoder_block_forward.1} parent=11 // pred_fallthru
          _
        // Predicated region
        $region33: #{decoder_block_forward.1} parent=11 // pred_check
          %p222 = pneg %p166
        $region34: #{decoder_block_forward.1} parent=11 // pred_check_branch
          %224 = sbr.rel (%p222) target = $region36
        $region35: #{decoder_block_forward.1} parent=11 // pred_region
          %226 = vsyncadd [#allocation3], 0
          %s227 = sshll.u32 %s6, 4
          %s228 = int_to_ptr.hbm [resolvable:$true] %s227
          %s229 = sshll.u32 [#allocation2], 4
          %s230 = int_to_ptr.vmem [resolvable:$true] %s229
          %235 = dma.hbm_to_vmem [thread:$0]  %s228, 32768, %s230, [#allocation3], 1024, 1024, 64
        $region36: #{decoder_block_forward.1} parent=11 // pred_fallthru
          _
      $region12: #{decoder_block_forward.1} parent=5 // pred_fallthru
        _
      %p236 = scmp.lt.s32.totalorder %s14, 2
      // Predicated region
      $region37: #{decoder_block_forward.1} parent=5 // pred_check
        %p237 = pneg %p236
      $region38: #{decoder_block_forward.1} parent=5 // pred_check_branch
        %239 = sbr.rel (%p237) target = $region40
      $region39: #{decoder_block_forward.1} parent=5 // pred_region
        // Predicated region
        $region41: #{decoder_block_forward.1} parent=39 // pred_check
          %p240 = pneg %p34
        $region42: #{decoder_block_forward.1} parent=39 // pred_check_branch
          %242 = sbr.rel (%p240) target = $region44
        $region43: #{decoder_block_forward.1} parent=39 // pred_region
          %p243 = scmp.lt.s32.totalorder %s14, 1
          %s244 = scalar_select %p243, %s14, 1
          %s245 = smul.addr %s244, 3
          %s246 = smul.addr %s245, 8
          %s247 = scalar_lea.vmem %s0, %s246
        $region44: #{decoder_block_forward.1} parent=39 // pred_fallthru
          _
      $region40: #{decoder_block_forward.1} parent=5 // pred_fallthru
        _
      %p248 = scmp.le.s32.totalorder 1, %s14
      %p249 = scmp.lt.s32.totalorder %s14, 3
      %p250 = pnand %p248, %p249
      %p251 = pneg %p250
      // Predicated region
      $region45: #{decoder_block_forward.1} parent=5 // pred_check
        _
      $region46: #{decoder_block_forward.1} parent=5 // pred_check_branch
        %253 = sbr.rel (%p250) target = $region48
      $region47: #{decoder_block_forward.1} parent=5 // pred_region
        %s254 = ssub.s32 %s14, 1
        // Predicated region
        $region49: #{decoder_block_forward.1} parent=47 // pred_check
          %p255 = pneg %p166
        $region50: #{decoder_block_forward.1} parent=47 // pred_check_branch
          %257 = sbr.rel (%p255) target = $region52
        $region51: #{decoder_block_forward.1} parent=47 // pred_region
          %259 = dma.done [#allocation3], 32768
        $region52: #{decoder_block_forward.1} parent=47 // pred_fallthru
          _
        %p260 = scmp.lt.s32.totalorder %s19, 1
        %s261 = scalar_select %p260, %s19, 1
        %s262 = smul.addr %s261, 3
        %s263 = smul.addr %s262, 8
        %s264 = scalar_lea.vmem %s0, %s263
        %p265 = pneg %p40
        %p266 = pneg %p37
        %p267 = pneg %p61
        %p268 = pneg %p58
        %p269 = pneg %p82
        %p270 = pneg %p79
        %p271 = pneg %p103
        %p272 = pneg %p100
        %p273 = pneg %p124
        %p274 = pneg %p121
        %p275 = pneg %p145
        %p276 = pneg %p142
        %p277 = pneg %p166
        %p278 = pneg %p163
        %p279 = pneg %p192
        %p280 = pneg %p189
        %p281 = scmp.lt.s32.totalorder %s19, 1
        %s282 = scalar_select %p281, %s19, 1
        %s283 = smul.addr %s282, 8
        %s284 = smul.addr %s283, 4
        %s285 = scalar_lea.vmem %s7, %s284
        %p286 = scmp.lt.s32.totalorder %s19, 1
        %s287 = scalar_select %p286, %s19, 1
        %s288 = smul.addr %s287, 3
        %s289 = smul.addr %s288, 8
        %s290 = scalar_lea.vmem %s0, %s289
        %p291 = scmp.lt.s32.totalorder %s19, 1
        %s292 = scalar_select %p291, %s19, 1
        %s293 = smul.addr %s292, 8
        %s294 = smul.addr %s293, 4
        %s295 = scalar_lea.vmem %s7, %s294
        %v296 = vld [vmem:[%s290] sm:$0xff]
        %v297 = vld [vmem:[%s290 + $0x8] sm:$0xff]
        %v298 = vld [vmem:[%s290 + $0x10] sm:$0xff]
        %v299 = vld [vmem:[%s5] sm:$0x3]
        %v301 = vperm.slane %v299, 0
        %v302 = vperm.slane %v299, 1
        %v305 = vmul.f32 %v296, %v301
        %v306 = vmul.f32 %v297, %v302
        %s307 = scalar_lea.vmem %s5, 4
        %v308 = vld [vmem:[%s307] sm:$0x3]
        %v310 = vperm.slane %v308, 0
        %v311 = vperm.slane %v308, 1
        %312 = vrot.lane.b32.xlu0 %v310, 2
        %v313 = vpop.permute.xlu0 %312
        %314 = vrot.lane.b32.xlu0 %v311, 2
        %v315 = vpop.permute.xlu0 %314
        %vm316 = vcmask 15360
        %v317 = vsel %vm316, %v313, %v315
        %v321 = vmul.f32 %v296, %v313
        %v322 = vmul.f32 %v297, %v317
        %v323 = vmul.f32 %v298, %v315
        %324 = vrot.lane.b32.xlu0 %v301, 16
        %v325 = vpop.permute.xlu0 %324
        %326 = vrot.lane.b32.xlu0 %v302, 16
        %v327 = vpop.permute.xlu0 %326
        %vm328 = vcmask 130048
        %v329 = vsel %vm328, %v325, %v327
        %v333 = vmul.f32 %v296, %v325
        %v334 = vmul.f32 %v297, %v329
        %v335 = vmul.f32 %v298, %v327
        %336 = vrot.lane.b32.xlu0 %v310, 18
        %v337 = vpop.permute.xlu0 %336
        %338 = vrot.lane.b32.xlu0 %v311, 18
        %v339 = vpop.permute.xlu0 %338
        %vm340 = vcmask 146432
        %v341 = vsel %vm340, %v337, %v339
        %v345 = vmul.f32 %v296, %v337
        %v346 = vmul.f32 %v297, %v341
        %v347 = vmul.f32 %v298, %v339
        %348 = vrot.lane.b32.xlu0 %v301, 32
        %v349 = vpop.permute.xlu0 %348
        %350 = vrot.lane.b32.xlu0 %v302, 32
        %v351 = vpop.permute.xlu0 %350
        %vm352 = vcmask 261120
        %v353 = vsel %vm352, %v349, %v351
        %v357 = vmul.f32 %v296, %v349
        %v358 = vmul.f32 %v297, %v353
        %v359 = vmul.f32 %v298, %v351
        %360 = vrot.lane.b32.xlu0 %v310, 34
        %v361 = vpop.permute.xlu0 %360
        %362 = vrot.lane.b32.xlu0 %v311, 34
        %v363 = vpop.permute.xlu0 %362
        %vm364 = vcmask 277504
        %v365 = vsel %vm364, %v361, %v363
        %v369 = vmul.f32 %v296, %v361
        %v370 = vmul.f32 %v297, %v365
        %v371 = vmul.f32 %v298, %v363
        %375 = vrot.lane.b32.xlu0 %v296, 127
        %v376 = vpop.permute.xlu0 %375
        %377 = vrot.lane.b32.xlu0 %v297, 127
        %v378 = vpop.permute.xlu0 %377
        %379 = vrot.lane.b32.xlu0 %v298, 127
        %v380 = vpop.permute.xlu0 %379
        %vm381 = vcmask 1039360
        %v382 = vsel %vm381, %v376, %v378
        %v383 = vsel %vm381, %v378, %v380
        %389 = vrot.lane.b32.xlu0 %v321, 126
        %v390 = vpop.permute.xlu0 %389
        %391 = vrot.lane.b32.xlu0 %v322, 126
        %v392 = vpop.permute.xlu0 %391
        %393 = vrot.lane.b32.xlu0 %v323, 126
        %v394 = vpop.permute.xlu0 %393
        %vm395 = vcmask 1031168
        %v396 = vsel %vm395, %v390, %v392
        %v397 = vsel %vm395, %v392, %v394
        %403 = vrot.lane.b32.xlu0 %v333, 112
        %v404 = vpop.permute.xlu0 %403
        %405 = vrot.lane.b32.xlu0 %v334, 112
        %v406 = vpop.permute.xlu0 %405
        %407 = vrot.lane.b32.xlu0 %v335, 112
        %v408 = vpop.permute.xlu0 %407
        %vm409 = vcmask 916480
        %v410 = vsel %vm409, %v404, %v406
        %v411 = vsel %vm409, %v406, %v408
        %414 = vrot.lane.b32.xlu0 %v296, 111
        %v415 = vpop.permute.xlu0 %414
        %416 = vrot.lane.b32.xlu0 %v297, 111
        %v417 = vpop.permute.xlu0 %416
        %418 = vrot.lane.b32.xlu0 %v298, 111
        %v419 = vpop.permute.xlu0 %418
        %vm420 = vcmask 908288
        %v421 = vsel %vm420, %v415, %v417
        %v422 = vsel %vm420, %v417, %v419
        %428 = vrot.lane.b32.xlu0 %v345, 110
        %v429 = vpop.permute.xlu0 %428
        %430 = vrot.lane.b32.xlu0 %v346, 110
        %v431 = vpop.permute.xlu0 %430
        %432 = vrot.lane.b32.xlu0 %v347, 110
        %v433 = vpop.permute.xlu0 %432
        %vm434 = vcmask 900096
        %v435 = vsel %vm434, %v429, %v431
        %v436 = vsel %vm434, %v431, %v433
        %442 = vrot.lane.b32.xlu0 %v357, 96
        %v443 = vpop.permute.xlu0 %442
        %444 = vrot.lane.b32.xlu0 %v358, 96
        %v445 = vpop.permute.xlu0 %444
        %446 = vrot.lane.b32.xlu0 %v359, 96
        %v447 = vpop.permute.xlu0 %446
        %vm448 = vcmask 785408
        %v449 = vsel %vm448, %v443, %v445
        %v450 = vsel %vm448, %v445, %v447
        %453 = vrot.lane.b32.xlu0 %v296, 95
        %v454 = vpop.permute.xlu0 %453
        %455 = vrot.lane.b32.xlu0 %v297, 95
        %v456 = vpop.permute.xlu0 %455
        %457 = vrot.lane.b32.xlu0 %v298, 95
        %v458 = vpop.permute.xlu0 %457
        %vm459 = vcmask 777216
        %v460 = vsel %vm459, %v454, %v456
        %v461 = vsel %vm459, %v456, %v458
        %467 = vrot.lane.b32.xlu0 %v369, 94
        %v468 = vpop.permute.xlu0 %467
        %469 = vrot.lane.b32.xlu0 %v370, 94
        %v470 = vpop.permute.xlu0 %469
        %471 = vrot.lane.b32.xlu0 %v371, 94
        %v472 = vpop.permute.xlu0 %471
        %vm473 = vcmask 769024
        %v474 = vsel %vm473, %v468, %v470
        %v475 = vsel %vm473, %v470, %v472
        %v478 = vld [vmem:[%s1] sm:$0xff]
        %v479 = vld [vmem:[%s2] sm:$0xff]
        %481 = vset.pattern.permute.xlu0 0
        %482 = vperm.xlu0 %481, %v479
        %v483 = vpop.permute.xlu0 %482
        %vm485 = vcmask 588800
        %v487 = vsel %vm485, %v478, 0
        %489 = vmatpush.msra.mxu0 0.0
        %490 = vmatpush.msra.mxu0 0.0
        %491 = vmatpush.msra.mxu0 0.0
        %492 = vmatpush.msra.mxu0 0.0
        %493 = vmatpush.msra.mxu0 0.0
        %494 = vmatpush.msra.mxu0 0.0
        %495 = vmatpush.msra.mxu0 0.0
        %496 = vmatpush.msra.mxu0 %v474
        %497 = vmatpush.msra.mxu0 %v460
        %498 = vmatpush.msra.mxu0 %v449
        %499 = vmatpush.msra.mxu0 %v435
        %500 = vmatpush.msra.mxu0 %v421
        %501 = vmatpush.msra.mxu0 %v410
        %502 = vmatpush.msra.mxu0 %v396
        %503 = vmatpush.msra.mxu0 %v382
        %504 = vmatpush.msra.mxu0 %v305
        %505 = vmatmul.f32.gmra.mxu0 %v487
        %v506 = vpop.f32.mrf.mxu0
        %v507 = vadd.f32 %v483, %v506
        %508 = vdwg.mxu0
        %509 = vmatpush.msra.mxu0 0.0
        %510 = vmatpush.msra.mxu0 0.0
        %511 = vmatpush.msra.mxu0 0.0
        %512 = vmatpush.msra.mxu0 0.0
        %513 = vmatpush.msra.mxu0 0.0
        %514 = vmatpush.msra.mxu0 0.0
        %515 = vmatpush.msra.mxu0 0.0
        %516 = vmatpush.msra.mxu0 %v475
        %517 = vmatpush.msra.mxu0 %v461
        %518 = vmatpush.msra.mxu0 %v450
        %519 = vmatpush.msra.mxu0 %v436
        %520 = vmatpush.msra.mxu0 %v422
        %521 = vmatpush.msra.mxu0 %v411
        %522 = vmatpush.msra.mxu0 %v397
        %523 = vmatpush.msra.mxu0 %v383
        %524 = vmatpush.msra.mxu0 %v306
        %525 = vmatmul.f32.gmra.mxu0 %v487
        %v526 = vpop.f32.mrf.mxu0
        %v527 = vadd.f32 %v483, %v526
        %528 = vdwg.mxu0
        %v529 = vmax.f32 %v507, 0.0
        %v530 = vmax.f32 %v527, 0.0
        %v531 = vld [vmem:[%s3] sm:$0xf]
        %v532 = vld [vmem:[%s4] sm:$0xf]
        %534 = vset.pattern.permute.xlu0 0
        %535 = vperm.xlu0 %534, %v532
        %v536 = vpop.permute.xlu0 %535
        %vm538 = vcmask 64512
        %v540 = vsel %vm538, %v531, 0
        %542 = vmatpush.msra.mxu0 0.0
        %543 = vmatpush.msra.mxu0 0.0
        %544 = vmatpush.msra.mxu0 0.0
        %545 = vmatpush.msra.mxu0 0.0
        %546 = vmatpush.msra.mxu0 0.0
        %547 = vmatpush.msra.mxu0 0.0
        %548 = vmatpush.msra.mxu0 0.0
        %549 = vmatpush.msra.mxu0 0.0
        %550 = vmatpush.msra.mxu0 0.0
        %551 = vmatpush.msra.mxu0 0.0
        %552 = vmatpush.msra.mxu0 0.0
        %553 = vmatpush.msra.mxu0 0.0
        %554 = vmatpush.msra.mxu0 0.0
        %555 = vmatpush.msra.mxu0 0.0
        %556 = vmatpush.msra.mxu0 0.0
        %557 = vmatpush.msra.mxu0 %v529
        %558 = vmatmul.f32.gmra.mxu0 %v540
        %v559 = vpop.f32.mrf.mxu0
        %v560 = vadd.f32 %v536, %v559
        %561 = vdwg.mxu0
        %562 = vmatpush.msra.mxu0 0.0
        %563 = vmatpush.msra.mxu0 0.0
        %564 = vmatpush.msra.mxu0 0.0
        %565 = vmatpush.msra.mxu0 0.0
        %566 = vmatpush.msra.mxu0 0.0
        %567 = vmatpush.msra.mxu0 0.0
        %568 = vmatpush.msra.mxu0 0.0
        %569 = vmatpush.msra.mxu0 0.0
        %570 = vmatpush.msra.mxu0 0.0
        %571 = vmatpush.msra.mxu0 0.0
        %572 = vmatpush.msra.mxu0 0.0
        %573 = vmatpush.msra.mxu0 0.0
        %574 = vmatpush.msra.mxu0 0.0
        %575 = vmatpush.msra.mxu0 0.0
        %576 = vmatpush.msra.mxu0 0.0
        %577 = vmatpush.msra.mxu0 %v530
        %578 = vmatmul.f32.gmra.mxu0 %v540
        %v579 = vpop.f32.mrf.mxu0
        %v580 = vadd.f32 %v536, %v579
        %581 = vdwg.mxu0
        %v582 = vld [vmem:[#allocation2] sm:$0xff]
        %v583 = vld [vmem:[#allocation2 + $0x8] sm:$0xff]
        %v584 = vld [vmem:[#allocation2 + $0x10] sm:$0xff]
        %v585 = vld [vmem:[#allocation2 + $0x18] sm:$0xff]
        %v586 = vld [vmem:[#allocation2 + $0x20] sm:$0xff]
        %v587 = vld [vmem:[#allocation2 + $0x28] sm:$0xff]
        %v588 = vld [vmem:[#allocation2 + $0x30] sm:$0xff]
        %v589 = vld [vmem:[#allocation2 + $0x38] sm:$0xff]
        %v590 = vld [vmem:[#allocation2 + $0x40] sm:$0xff]
        %v591 = vld [vmem:[#allocation2 + $0x48] sm:$0xff]
        %v592 = vld [vmem:[#allocation2 + $0x50] sm:$0xff]
        %v593 = vld [vmem:[#allocation2 + $0x58] sm:$0xff]
        %v594 = vld [vmem:[#allocation2 + $0x60] sm:$0xff]
        %v595 = vld [vmem:[#allocation2 + $0x68] sm:$0xff]
        %v596 = vld [vmem:[#allocation2 + $0x70] sm:$0xff]
        %v597 = vld [vmem:[#allocation2 + $0x78] sm:$0xff]
        %v598 = vld [vmem:[#allocation2 + $0x80] sm:$0xff]
        %v599 = vld [vmem:[#allocation2 + $0x88] sm:$0xff]
        %v600 = vld [vmem:[#allocation2 + $0x90] sm:$0xff]
        %v601 = vld [vmem:[#allocation2 + $0x98] sm:$0xff]
        %v602 = vld [vmem:[#allocation2 + $0xa0] sm:$0xff]
        %v603 = vld [vmem:[#allocation2 + $0xa8] sm:$0xff]
        %v604 = vld [vmem:[#allocation2 + $0xb0] sm:$0xff]
        %v605 = vld [vmem:[#allocation2 + $0xb8] sm:$0xff]
        %v606 = vld [vmem:[#allocation2 + $0xc0] sm:$0xff]
        %v607 = vld [vmem:[#allocation2 + $0xc8] sm:$0xff]
        %v608 = vld [vmem:[#allocation2 + $0xd0] sm:$0xff]
        %v609 = vld [vmem:[#allocation2 + $0xd8] sm:$0xff]
        %v610 = vld [vmem:[#allocation2 + $0xe0] sm:$0xff]
        %v611 = vld [vmem:[#allocation2 + $0xe8] sm:$0xff]
        %v612 = vld [vmem:[#allocation2 + $0xf0] sm:$0xff]
        %v613 = vld [vmem:[#allocation2 + $0xf8] sm:$0xff]
        %v614 = vld [vmem:[#allocation2 + $0x100] sm:$0xff]
        %v615 = vld [vmem:[#allocation2 + $0x108] sm:$0xff]
        %v616 = vld [vmem:[#allocation2 + $0x110] sm:$0xff]
        %v617 = vld [vmem:[#allocation2 + $0x118] sm:$0xff]
        %v618 = vld [vmem:[#allocation2 + $0x120] sm:$0xff]
        %v619 = vld [vmem:[#allocation2 + $0x128] sm:$0xff]
        %v620 = vld [vmem:[#allocation2 + $0x130] sm:$0xff]
        %v621 = vld [vmem:[#allocation2 + $0x138] sm:$0xff]
        %v622 = vld [vmem:[#allocation2 + $0x140] sm:$0xff]
        %v623 = vld [vmem:[#allocation2 + $0x148] sm:$0xff]
        %v624 = vld [vmem:[#allocation2 + $0x150] sm:$0xff]
        %v625 = vld [vmem:[#allocation2 + $0x158] sm:$0xff]
        %v626 = vld [vmem:[#allocation2 + $0x160] sm:$0xff]
        %v627 = vld [vmem:[#allocation2 + $0x168] sm:$0xff]
        %v628 = vld [vmem:[#allocation2 + $0x170] sm:$0xff]
        %v629 = vld [vmem:[#allocation2 + $0x178] sm:$0xff]
        %v630 = vld [vmem:[#allocation2 + $0x180] sm:$0xff]
        %v631 = vld [vmem:[#allocation2 + $0x188] sm:$0xff]
        %v632 = vld [vmem:[#allocation2 + $0x190] sm:$0xff]
        %v633 = vld [vmem:[#allocation2 + $0x198] sm:$0xff]
        %v634 = vld [vmem:[#allocation2 + $0x1a0] sm:$0xff]
        %v635 = vld [vmem:[#allocation2 + $0x1a8] sm:$0xff]
        %v636 = vld [vmem:[#allocation2 + $0x1b0] sm:$0xff]
        %v637 = vld [vmem:[#allocation2 + $0x1b8] sm:$0xff]
        %v638 = vld [vmem:[#allocation2 + $0x1c0] sm:$0xff]
        %v639 = vld [vmem:[#allocation2 + $0x1c8] sm:$0xff]
        %v640 = vld [vmem:[#allocation2 + $0x1d0] sm:$0xff]
        %v641 = vld [vmem:[#allocation2 + $0x1d8] sm:$0xff]
        %v642 = vld [vmem:[#allocation2 + $0x1e0] sm:$0xff]
        %v643 = vld [vmem:[#allocation2 + $0x1e8] sm:$0xff]
        %v644 = vld [vmem:[#allocation2 + $0x1f0] sm:$0xff]
        %v645 = vld [vmem:[#allocation2 + $0x1f8] sm:$0xff]
        %v646 = vld [vmem:[#allocation2 + $0x200] sm:$0xff]
        %v647 = vld [vmem:[#allocation2 + $0x208] sm:$0xff]
        %v648 = vld [vmem:[#allocation2 + $0x210] sm:$0xff]
        %v649 = vld [vmem:[#allocation2 + $0x218] sm:$0xff]
        %v650 = vld [vmem:[#allocation2 + $0x220] sm:$0xff]
        %v651 = vld [vmem:[#allocation2 + $0x228] sm:$0xff]
        %v652 = vld [vmem:[#allocation2 + $0x230] sm:$0xff]
        %v653 = vld [vmem:[#allocation2 + $0x238] sm:$0xff]
        %v654 = vld [vmem:[#allocation2 + $0x240] sm:$0xff]
        %v655 = vld [vmem:[#allocation2 + $0x248] sm:$0xff]
        %v656 = vld [vmem:[#allocation2 + $0x250] sm:$0xff]
        %v657 = vld [vmem:[#allocation2 + $0x258] sm:$0xff]
        %v658 = vld [vmem:[#allocation2 + $0x260] sm:$0xff]
        %v659 = vld [vmem:[#allocation2 + $0x268] sm:$0xff]
        %v660 = vld [vmem:[#allocation2 + $0x270] sm:$0xff]
        %v661 = vld [vmem:[#allocation2 + $0x278] sm:$0xff]
        %v662 = vld [vmem:[#allocation2 + $0x280] sm:$0xff]
        %v663 = vld [vmem:[#allocation2 + $0x288] sm:$0xff]
        %v664 = vld [vmem:[#allocation2 + $0x290] sm:$0xff]
        %v665 = vld [vmem:[#allocation2 + $0x298] sm:$0xff]
        %v666 = vld [vmem:[#allocation2 + $0x2a0] sm:$0xff]
        %v667 = vld [vmem:[#allocation2 + $0x2a8] sm:$0xff]
        %v668 = vld [vmem:[#allocation2 + $0x2b0] sm:$0xff]
        %v669 = vld [vmem:[#allocation2 + $0x2b8] sm:$0xff]
        %v670 = vld [vmem:[#allocation2 + $0x2c0] sm:$0xff]
        %v671 = vld [vmem:[#allocation2 + $0x2c8] sm:$0xff]
        %v672 = vld [vmem:[#allocation2 + $0x2d0] sm:$0xff]
        %v673 = vld [vmem:[#allocation2 + $0x2d8] sm:$0xff]
        %v674 = vld [vmem:[#allocation2 + $0x2e0] sm:$0xff]
        %v675 = vld [vmem:[#allocation2 + $0x2e8] sm:$0xff]
        %v676 = vld [vmem:[#allocation2 + $0x2f0] sm:$0xff]
        %v677 = vld [vmem:[#allocation2 + $0x2f8] sm:$0xff]
        %v678 = vld [vmem:[#allocation2 + $0x300] sm:$0xff]
        %v679 = vld [vmem:[#allocation2 + $0x308] sm:$0xff]
        %v680 = vld [vmem:[#allocation2 + $0x310] sm:$0xff]
        %v681 = vld [vmem:[#allocation2 + $0x318] sm:$0xff]
        %v682 = vld [vmem:[#allocation2 + $0x320] sm:$0xff]
        %v683 = vld [vmem:[#allocation2 + $0x328] sm:$0xff]
        %v684 = vld [vmem:[#allocation2 + $0x330] sm:$0xff]
        %v685 = vld [vmem:[#allocation2 + $0x338] sm:$0xff]
        %v686 = vld [vmem:[#allocation2 + $0x340] sm:$0xff]
        %v687 = vld [vmem:[#allocation2 + $0x348] sm:$0xff]
        %v688 = vld [vmem:[#allocation2 + $0x350] sm:$0xff]
        %v689 = vld [vmem:[#allocation2 + $0x358] sm:$0xff]
        %v690 = vld [vmem:[#allocation2 + $0x360] sm:$0xff]
        %v691 = vld [vmem:[#allocation2 + $0x368] sm:$0xff]
        %v692 = vld [vmem:[#allocation2 + $0x370] sm:$0xff]
        %v693 = vld [vmem:[#allocation2 + $0x378] sm:$0xff]
        %v694 = vld [vmem:[#allocation2 + $0x380] sm:$0xff]
        %v695 = vld [vmem:[#allocation2 + $0x388] sm:$0xff]
        %v696 = vld [vmem:[#allocation2 + $0x390] sm:$0xff]
        %v697 = vld [vmem:[#allocation2 + $0x398] sm:$0xff]
        %v698 = vld [vmem:[#allocation2 + $0x3a0] sm:$0xff]
        %v699 = vld [vmem:[#allocation2 + $0x3a8] sm:$0xff]
        %v700 = vld [vmem:[#allocation2 + $0x3b0] sm:$0xff]
        %v701 = vld [vmem:[#allocation2 + $0x3b8] sm:$0xff]
        %v702 = vld [vmem:[#allocation2 + $0x3c0] sm:$0xff]
        %v703 = vld [vmem:[#allocation2 + $0x3c8] sm:$0xff]
        %v704 = vld [vmem:[#allocation2 + $0x3d0] sm:$0xff]
        %v705 = vld [vmem:[#allocation2 + $0x3d8] sm:$0xff]
        %v706 = vld [vmem:[#allocation2 + $0x3e0] sm:$0xff]
        %v707 = vld [vmem:[#allocation2 + $0x3e8] sm:$0xff]
        %v708 = vld [vmem:[#allocation2 + $0x3f0] sm:$0xff]
        %v709 = vld [vmem:[#allocation2 + $0x3f8] sm:$0xff]
        %v710 = vld [vmem:[#allocation2 + $0x400] sm:$0xff]
        %v711 = vld [vmem:[#allocation2 + $0x408] sm:$0xff]
        %v712 = vld [vmem:[#allocation2 + $0x410] sm:$0xff]
        %v713 = vld [vmem:[#allocation2 + $0x418] sm:$0xff]
        %v714 = vld [vmem:[#allocation2 + $0x420] sm:$0xff]
        %v715 = vld [vmem:[#allocation2 + $0x428] sm:$0xff]
        %v716 = vld [vmem:[#allocation2 + $0x430] sm:$0xff]
        %v717 = vld [vmem:[#allocation2 + $0x438] sm:$0xff]
        %v718 = vld [vmem:[#allocation2 + $0x440] sm:$0xff]
        %v719 = vld [vmem:[#allocation2 + $0x448] sm:$0xff]
        %v720 = vld [vmem:[#allocation2 + $0x450] sm:$0xff]
        %v721 = vld [vmem:[#allocation2 + $0x458] sm:$0xff]
        %v722 = vld [vmem:[#allocation2 + $0x460] sm:$0xff]
        %v723 = vld [vmem:[#allocation2 + $0x468] sm:$0xff]
        %v724 = vld [vmem:[#allocation2 + $0x470] sm:$0xff]
        %v725 = vld [vmem:[#allocation2 + $0x478] sm:$0xff]
        %v726 = vld [vmem:[#allocation2 + $0x480] sm:$0xff]
        %v727 = vld [vmem:[#allocation2 + $0x488] sm:$0xff]
        %v728 = vld [vmem:[#allocation2 + $0x490] sm:$0xff]
        %v729 = vld [vmem:[#allocation2 + $0x498] sm:$0xff]
        %v730 = vld [vmem:[#allocation2 + $0x4a0] sm:$0xff]
        %v731 = vld [vmem:[#allocation2 + $0x4a8] sm:$0xff]
        %v732 = vld [vmem:[#allocation2 + $0x4b0] sm:$0xff]
        %v733 = vld [vmem:[#allocation2 + $0x4b8] sm:$0xff]
        %v734 = vld [vmem:[#allocation2 + $0x4c0] sm:$0xff]
        %v735 = vld [vmem:[#allocation2 + $0x4c8] sm:$0xff]
        %v736 = vld [vmem:[#allocation2 + $0x4d0] sm:$0xff]
        %v737 = vld [vmem:[#allocation2 + $0x4d8] sm:$0xff]
        %v738 = vld [vmem:[#allocation2 + $0x4e0] sm:$0xff]
        %v739 = vld [vmem:[#allocation2 + $0x4e8] sm:$0xff]
        %v740 = vld [vmem:[#allocation2 + $0x4f0] sm:$0xff]
        %v741 = vld [vmem:[#allocation2 + $0x4f8] sm:$0xff]
        %v742 = vld [vmem:[#allocation2 + $0x500] sm:$0xff]
        %v743 = vld [vmem:[#allocation2 + $0x508] sm:$0xff]
        %v744 = vld [vmem:[#allocation2 + $0x510] sm:$0xff]
        %v745 = vld [vmem:[#allocation2 + $0x518] sm:$0xff]
        %v746 = vld [vmem:[#allocation2 + $0x520] sm:$0xff]
        %v747 = vld [vmem:[#allocation2 + $0x528] sm:$0xff]
        %v748 = vld [vmem:[#allocation2 + $0x530] sm:$0xff]
        %v749 = vld [vmem:[#allocation2 + $0x538] sm:$0xff]
        %v750 = vld [vmem:[#allocation2 + $0x540] sm:$0xff]
        %v751 = vld [vmem:[#allocation2 + $0x548] sm:$0xff]
        %v752 = vld [vmem:[#allocation2 + $0x550] sm:$0xff]
        %v753 = vld [vmem:[#allocation2 + $0x558] sm:$0xff]
        %v754 = vld [vmem:[#allocation2 + $0x560] sm:$0xff]
        %v755 = vld [vmem:[#allocation2 + $0x568] sm:$0xff]
        %v756 = vld [vmem:[#allocation2 + $0x570] sm:$0xff]
        %v757 = vld [vmem:[#allocation2 + $0x578] sm:$0xff]
        %v758 = vld [vmem:[#allocation2 + $0x580] sm:$0xff]
        %v759 = vld [vmem:[#allocation2 + $0x588] sm:$0xff]
        %v760 = vld [vmem:[#allocation2 + $0x590] sm:$0xff]
        %v761 = vld [vmem:[#allocation2 + $0x598] sm:$0xff]
        %v762 = vld [vmem:[#allocation2 + $0x5a0] sm:$0xff]
        %v763 = vld [vmem:[#allocation2 + $0x5a8] sm:$0xff]
        %v764 = vld [vmem:[#allocation2 + $0x5b0] sm:$0xff]
        %v765 = vld [vmem:[#allocation2 + $0x5b8] sm:$0xff]
        %v766 = vld [vmem:[#allocation2 + $0x5c0] sm:$0xff]
        %v767 = vld [vmem:[#allocation2 + $0x5c8] sm:$0xff]
        %v768 = vld [vmem:[#allocation2 + $0x5d0] sm:$0xff]
        %v769 = vld [vmem:[#allocation2 + $0x5d8] sm:$0xff]
        %v770 = vld [vmem:[#allocation2 + $0x5e0] sm:$0xff]
        %v771 = vld [vmem:[#allocation2 + $0x5e8] sm:$0xff]
        %v772 = vld [vmem:[#allocation2 + $0x5f0] sm:$0xff]
        %v773 = vld [vmem:[#allocation2 + $0x5f8] sm:$0xff]
        %v774 = vld [vmem:[#allocation2 + $0x600] sm:$0xff]
        %v775 = vld [vmem:[#allocation2 + $0x608] sm:$0xff]
        %v776 = vld [vmem:[#allocation2 + $0x610] sm:$0xff]
        %v777 = vld [vmem:[#allocation2 + $0x618] sm:$0xff]
        %v778 = vld [vmem:[#allocation2 + $0x620] sm:$0xff]
        %v779 = vld [vmem:[#allocation2 + $0x628] sm:$0xff]
        %v780 = vld [vmem:[#allocation2 + $0x630] sm:$0xff]
        %v781 = vld [vmem:[#allocation2 + $0x638] sm:$0xff]
        %v782 = vld [vmem:[#allocation2 + $0x640] sm:$0xff]
        %v783 = vld [vmem:[#allocation2 + $0x648] sm:$0xff]
        %v784 = vld [vmem:[#allocation2 + $0x650] sm:$0xff]
        %v785 = vld [vmem:[#allocation2 + $0x658] sm:$0xff]
        %v786 = vld [vmem:[#allocation2 + $0x660] sm:$0xff]
        %v787 = vld [vmem:[#allocation2 + $0x668] sm:$0xff]
        %v788 = vld [vmem:[#allocation2 + $0x670] sm:$0xff]
        %v789 = vld [vmem:[#allocation2 + $0x678] sm:$0xff]
        %v790 = vld [vmem:[#allocation2 + $0x680] sm:$0xff]
        %v791 = vld [vmem:[#allocation2 + $0x688] sm:$0xff]
        %v792 = vld [vmem:[#allocation2 + $0x690] sm:$0xff]
        %v793 = vld [vmem:[#allocation2 + $0x698] sm:$0xff]
        %v794 = vld [vmem:[#allocation2 + $0x6a0] sm:$0xff]
        %v795 = vld [vmem:[#allocation2 + $0x6a8] sm:$0xff]
        %v796 = vld [vmem:[#allocation2 + $0x6b0] sm:$0xff]
        %v797 = vld [vmem:[#allocation2 + $0x6b8] sm:$0xff]
        %v798 = vld [vmem:[#allocation2 + $0x6c0] sm:$0xff]
        %v799 = vld [vmem:[#allocation2 + $0x6c8] sm:$0xff]
        %v800 = vld [vmem:[#allocation2 + $0x6d0] sm:$0xff]
        %v801 = vld [vmem:[#allocation2 + $0x6d8] sm:$0xff]
        %v802 = vld [vmem:[#allocation2 + $0x6e0] sm:$0xff]
        %v803 = vld [vmem:[#allocation2 + $0x6e8] sm:$0xff]
        %v804 = vld [vmem:[#allocation2 + $0x6f0] sm:$0xff]
        %v805 = vld [vmem:[#allocation2 + $0x6f8] sm:$0xff]
        %v806 = vld [vmem:[#allocation2 + $0x700] sm:$0xff]
        %v807 = vld [vmem:[#allocation2 + $0x708] sm:$0xff]
        %v808 = vld [vmem:[#allocation2 + $0x710] sm:$0xff]
        %v809 = vld [vmem:[#allocation2 + $0x718] sm:$0xff]
        %v810 = vld [vmem:[#allocation2 + $0x720] sm:$0xff]
        %v811 = vld [vmem:[#allocation2 + $0x728] sm:$0xff]
        %v812 = vld [vmem:[#allocation2 + $0x730] sm:$0xff]
        %v813 = vld [vmem:[#allocation2 + $0x738] sm:$0xff]
        %v814 = vld [vmem:[#allocation2 + $0x740] sm:$0xff]
        %v815 = vld [vmem:[#allocation2 + $0x748] sm:$0xff]
        %v816 = vld [vmem:[#allocation2 + $0x750] sm:$0xff]
        %v817 = vld [vmem:[#allocation2 + $0x758] sm:$0xff]
        %v818 = vld [vmem:[#allocation2 + $0x760] sm:$0xff]
        %v819 = vld [vmem:[#allocation2 + $0x768] sm:$0xff]
        %v820 = vld [vmem:[#allocation2 + $0x770] sm:$0xff]
        %v821 = vld [vmem:[#allocation2 + $0x778] sm:$0xff]
        %v822 = vld [vmem:[#allocation2 + $0x780] sm:$0xff]
        %v823 = vld [vmem:[#allocation2 + $0x788] sm:$0xff]
        %v824 = vld [vmem:[#allocation2 + $0x790] sm:$0xff]
        %v825 = vld [vmem:[#allocation2 + $0x798] sm:$0xff]
        %v826 = vld [vmem:[#allocation2 + $0x7a0] sm:$0xff]
        %v827 = vld [vmem:[#allocation2 + $0x7a8] sm:$0xff]
        %v828 = vld [vmem:[#allocation2 + $0x7b0] sm:$0xff]
        %v829 = vld [vmem:[#allocation2 + $0x7b8] sm:$0xff]
        %v830 = vld [vmem:[#allocation2 + $0x7c0] sm:$0xff]
        %v831 = vld [vmem:[#allocation2 + $0x7c8] sm:$0xff]
        %v832 = vld [vmem:[#allocation2 + $0x7d0] sm:$0xff]
        %v833 = vld [vmem:[#allocation2 + $0x7d8] sm:$0xff]
        %v834 = vld [vmem:[#allocation2 + $0x7e0] sm:$0xff]
        %v835 = vld [vmem:[#allocation2 + $0x7e8] sm:$0xff]
        %v836 = vld [vmem:[#allocation2 + $0x7f0] sm:$0xff]
        %v837 = vld [vmem:[#allocation2 + $0x7f8] sm:$0xff]
        %838 = vmatpush.msra.mxu0 %v702
        %839 = vmatpush.msra.mxu0 %v694
        %840 = vmatpush.msra.mxu0 %v686
        %841 = vmatpush.msra.mxu0 %v678
        %842 = vmatpush.msra.mxu0 %v670
        %843 = vmatpush.msra.mxu0 %v662
        %844 = vmatpush.msra.mxu0 %v654
        %845 = vmatpush.msra.mxu0 %v646
        %846 = vmatpush.msra.mxu0 %v638
        %847 = vmatpush.msra.mxu0 %v630
        %848 = vmatpush.msra.mxu0 %v622
        %849 = vmatpush.msra.mxu0 %v614
        %850 = vmatpush.msra.mxu0 %v606
        %851 = vmatpush.msra.mxu0 %v598
        %852 = vmatpush.msra.mxu0 %v590
        %853 = vmatpush.msra.mxu0 %v582
        %854 = vmatmul.f32.gmra.mxu0 %v560
        %v855 = vpop.f32.mrf.mxu0
        %v856 = vadd.f32 0.0, %v855
        %857 = vdwg.mxu0
        %858 = vmatpush.msra.mxu0 %v830
        %859 = vmatpush.msra.mxu0 %v822
        %860 = vmatpush.msra.mxu0 %v814
        %861 = vmatpush.msra.mxu0 %v806
        %862 = vmatpush.msra.mxu0 %v798
        %863 = vmatpush.msra.mxu0 %v790
        %864 = vmatpush.msra.mxu0 %v782
        %865 = vmatpush.msra.mxu0 %v774
        %866 = vmatpush.msra.mxu0 %v766
        %867 = vmatpush.msra.mxu0 %v758
        %868 = vmatpush.msra.mxu0 %v750
        %869 = vmatpush.msra.mxu0 %v742
        %870 = vmatpush.msra.mxu0 %v734
        %871 = vmatpush.msra.mxu0 %v726
        %872 = vmatpush.msra.mxu0 %v718
        %873 = vmatpush.msra.mxu0 %v710
        %874 = vmatmul.f32.gmra.mxu0 %v580
        %v875 = vpop.f32.mrf.mxu0
        %v876 = vadd.f32 %v856, %v875
        %877 = vdwg.mxu0
        %878 = vmatpush.msra.mxu0 %v703
        %879 = vmatpush.msra.mxu0 %v695
        %880 = vmatpush.msra.mxu0 %v687
        %881 = vmatpush.msra.mxu0 %v679
        %882 = vmatpush.msra.mxu0 %v671
        %883 = vmatpush.msra.mxu0 %v663
        %884 = vmatpush.msra.mxu0 %v655
        %885 = vmatpush.msra.mxu0 %v647
        %886 = vmatpush.msra.mxu0 %v639
        %887 = vmatpush.msra.mxu0 %v631
        %888 = vmatpush.msra.mxu0 %v623
        %889 = vmatpush.msra.mxu0 %v615
        %890 = vmatpush.msra.mxu0 %v607
        %891 = vmatpush.msra.mxu0 %v599
        %892 = vmatpush.msra.mxu0 %v591
        %893 = vmatpush.msra.mxu0 %v583
        %894 = vmatmul.f32.gmra.mxu0 %v560
        %v895 = vpop.f32.mrf.mxu0
        %v896 = vadd.f32 0.0, %v895
        %897 = vdwg.mxu0
        %898 = vmatpush.msra.mxu0 %v831
        %899 = vmatpush.msra.mxu0 %v823
        %900 = vmatpush.msra.mxu0 %v815
        %901 = vmatpush.msra.mxu0 %v807
        %902 = vmatpush.msra.mxu0 %v799
        %903 = vmatpush.msra.mxu0 %v791
        %904 = vmatpush.msra.mxu0 %v783
        %905 = vmatpush.msra.mxu0 %v775
        %906 = vmatpush.msra.mxu0 %v767
        %907 = vmatpush.msra.mxu0 %v759
        %908 = vmatpush.msra.mxu0 %v751
        %909 = vmatpush.msra.mxu0 %v743
        %910 = vmatpush.msra.mxu0 %v735
        %911 = vmatpush.msra.mxu0 %v727
        %912 = vmatpush.msra.mxu0 %v719
        %913 = vmatpush.msra.mxu0 %v711
        %914 = vmatmul.f32.gmra.mxu0 %v580
        %v915 = vpop.f32.mrf.mxu0
        %v916 = vadd.f32 %v896, %v915
        %917 = vdwg.mxu0
        %918 = vmatpush.msra.mxu0 %v704
        %919 = vmatpush.msra.mxu0 %v696
        %920 = vmatpush.msra.mxu0 %v688
        %921 = vmatpush.msra.mxu0 %v680
        %922 = vmatpush.msra.mxu0 %v672
        %923 = vmatpush.msra.mxu0 %v664
        %924 = vmatpush.msra.mxu0 %v656
        %925 = vmatpush.msra.mxu0 %v648
        %926 = vmatpush.msra.mxu0 %v640
        %927 = vmatpush.msra.mxu0 %v632
        %928 = vmatpush.msra.mxu0 %v624
        %929 = vmatpush.msra.mxu0 %v616
        %930 = vmatpush.msra.mxu0 %v608
        %931 = vmatpush.msra.mxu0 %v600
        %932 = vmatpush.msra.mxu0 %v592
        %933 = vmatpush.msra.mxu0 %v584
        %934 = vmatmul.f32.gmra.mxu0 %v560
        %v935 = vpop.f32.mrf.mxu0
        %v936 = vadd.f32 0.0, %v935
        %937 = vdwg.mxu0
        %938 = vmatpush.msra.mxu0 %v832
        %939 = vmatpush.msra.mxu0 %v824
        %940 = vmatpush.msra.mxu0 %v816
        %941 = vmatpush.msra.mxu0 %v808
        %942 = vmatpush.msra.mxu0 %v800
        %943 = vmatpush.msra.mxu0 %v792
        %944 = vmatpush.msra.mxu0 %v784
        %945 = vmatpush.msra.mxu0 %v776
        %946 = vmatpush.msra.mxu0 %v768
        %947 = vmatpush.msra.mxu0 %v760
        %948 = vmatpush.msra.mxu0 %v752
        %949 = vmatpush.msra.mxu0 %v744
        %950 = vmatpush.msra.mxu0 %v736
        %951 = vmatpush.msra.mxu0 %v728
        %952 = vmatpush.msra.mxu0 %v720
        %953 = vmatpush.msra.mxu0 %v712
        %954 = vmatmul.f32.gmra.mxu0 %v580
        %v955 = vpop.f32.mrf.mxu0
        %v956 = vadd.f32 %v936, %v955
        %957 = vdwg.mxu0
        %958 = vmatpush.msra.mxu0 %v705
        %959 = vmatpush.msra.mxu0 %v697
        %960 = vmatpush.msra.mxu0 %v689
        %961 = vmatpush.msra.mxu0 %v681
        %962 = vmatpush.msra.mxu0 %v673
        %963 = vmatpush.msra.mxu0 %v665
        %964 = vmatpush.msra.mxu0 %v657
        %965 = vmatpush.msra.mxu0 %v649
        %966 = vmatpush.msra.mxu0 %v641
        %967 = vmatpush.msra.mxu0 %v633
        %968 = vmatpush.msra.mxu0 %v625
        %969 = vmatpush.msra.mxu0 %v617
        %970 = vmatpush.msra.mxu0 %v609
        %971 = vmatpush.msra.mxu0 %v601
        %972 = vmatpush.msra.mxu0 %v593
        %973 = vmatpush.msra.mxu0 %v585
        %974 = vmatmul.f32.gmra.mxu0 %v560
        %v975 = vpop.f32.mrf.mxu0
        %v976 = vadd.f32 0.0, %v975
        %977 = vdwg.mxu0
        %978 = vmatpush.msra.mxu0 %v833
        %979 = vmatpush.msra.mxu0 %v825
        %980 = vmatpush.msra.mxu0 %v817
        %981 = vmatpush.msra.mxu0 %v809
        %982 = vmatpush.msra.mxu0 %v801
        %983 = vmatpush.msra.mxu0 %v793
        %984 = vmatpush.msra.mxu0 %v785
        %985 = vmatpush.msra.mxu0 %v777
        %986 = vmatpush.msra.mxu0 %v769
        %987 = vmatpush.msra.mxu0 %v761
        %988 = vmatpush.msra.mxu0 %v753
        %989 = vmatpush.msra.mxu0 %v745
        %990 = vmatpush.msra.mxu0 %v737
        %991 = vmatpush.msra.mxu0 %v729
        %992 = vmatpush.msra.mxu0 %v721
        %993 = vmatpush.msra.mxu0 %v713
        %994 = vmatmul.f32.gmra.mxu0 %v580
        %v995 = vpop.f32.mrf.mxu0
        %v996 = vadd.f32 %v976, %v995
        %997 = vdwg.mxu0
        %998 = vmatpush.msra.mxu0 %v706
        %999 = vmatpush.msra.mxu0 %v698
        %1000 = vmatpush.msra.mxu0 %v690
        %1001 = vmatpush.msra.mxu0 %v682
        %1002 = vmatpush.msra.mxu0 %v674
        %1003 = vmatpush.msra.mxu0 %v666
        %1004 = vmatpush.msra.mxu0 %v658
        %1005 = vmatpush.msra.mxu0 %v650
        %1006 = vmatpush.msra.mxu0 %v642
        %1007 = vmatpush.msra.mxu0 %v634
        %1008 = vmatpush.msra.mxu0 %v626
        %1009 = vmatpush.msra.mxu0 %v618
        %1010 = vmatpush.msra.mxu0 %v610
        %1011 = vmatpush.msra.mxu0 %v602
        %1012 = vmatpush.msra.mxu0 %v594
        %1013 = vmatpush.msra.mxu0 %v586
        %1014 = vmatmul.f32.gmra.mxu0 %v560
        %v1015 = vpop.f32.mrf.mxu0
        %v1016 = vadd.f32 0.0, %v1015
        %1017 = vdwg.mxu0
        %1018 = vmatpush.msra.mxu0 %v834
        %1019 = vmatpush.msra.mxu0 %v826
        %1020 = vmatpush.msra.mxu0 %v818
        %1021 = vmatpush.msra.mxu0 %v810
        %1022 = vmatpush.msra.mxu0 %v802
        %1023 = vmatpush.msra.mxu0 %v794
        %1024 = vmatpush.msra.mxu0 %v786
        %1025 = vmatpush.msra.mxu0 %v778
        %1026 = vmatpush.msra.mxu0 %v770
        %1027 = vmatpush.msra.mxu0 %v762
        %1028 = vmatpush.msra.mxu0 %v754
        %1029 = vmatpush.msra.mxu0 %v746
        %1030 = vmatpush.msra.mxu0 %v738
        %1031 = vmatpush.msra.mxu0 %v730
        %1032 = vmatpush.msra.mxu0 %v722
        %1033 = vmatpush.msra.mxu0 %v714
        %1034 = vmatmul.f32.gmra.mxu0 %v580
        %v1035 = vpop.f32.mrf.mxu0
        %v1036 = vadd.f32 %v1016, %v1035
        %1037 = vdwg.mxu0
        %1038 = vmatpush.msra.mxu0 %v707
        %1039 = vmatpush.msra.mxu0 %v699
        %1040 = vmatpush.msra.mxu0 %v691
        %1041 = vmatpush.msra.mxu0 %v683
        %1042 = vmatpush.msra.mxu0 %v675
        %1043 = vmatpush.msra.mxu0 %v667
        %1044 = vmatpush.msra.mxu0 %v659
        %1045 = vmatpush.msra.mxu0 %v651
        %1046 = vmatpush.msra.mxu0 %v643
        %1047 = vmatpush.msra.mxu0 %v635
        %1048 = vmatpush.msra.mxu0 %v627
        %1049 = vmatpush.msra.mxu0 %v619
        %1050 = vmatpush.msra.mxu0 %v611
        %1051 = vmatpush.msra.mxu0 %v603
        %1052 = vmatpush.msra.mxu0 %v595
        %1053 = vmatpush.msra.mxu0 %v587
        %1054 = vmatmul.f32.gmra.mxu0 %v560
        %v1055 = vpop.f32.mrf.mxu0
        %v1056 = vadd.f32 0.0, %v1055
        %1057 = vdwg.mxu0
        %1058 = vmatpush.msra.mxu0 %v835
        %1059 = vmatpush.msra.mxu0 %v827
        %1060 = vmatpush.msra.mxu0 %v819
        %1061 = vmatpush.msra.mxu0 %v811
        %1062 = vmatpush.msra.mxu0 %v803
        %1063 = vmatpush.msra.mxu0 %v795
        %1064 = vmatpush.msra.mxu0 %v787
        %1065 = vmatpush.msra.mxu0 %v779
        %1066 = vmatpush.msra.mxu0 %v771
        %1067 = vmatpush.msra.mxu0 %v763
        %1068 = vmatpush.msra.mxu0 %v755
        %1069 = vmatpush.msra.mxu0 %v747
        %1070 = vmatpush.msra.mxu0 %v739
        %1071 = vmatpush.msra.mxu0 %v731
        %1072 = vmatpush.msra.mxu0 %v723
        %1073 = vmatpush.msra.mxu0 %v715
        %1074 = vmatmul.f32.gmra.mxu0 %v580
        %v1075 = vpop.f32.mrf.mxu0
        %v1076 = vadd.f32 %v1056, %v1075
        %1077 = vdwg.mxu0
        %1078 = vmatpush.msra.mxu0 %v708
        %1079 = vmatpush.msra.mxu0 %v700
        %1080 = vmatpush.msra.mxu0 %v692
        %1081 = vmatpush.msra.mxu0 %v684
        %1082 = vmatpush.msra.mxu0 %v676
        %1083 = vmatpush.msra.mxu0 %v668
        %1084 = vmatpush.msra.mxu0 %v660
        %1085 = vmatpush.msra.mxu0 %v652
        %1086 = vmatpush.msra.mxu0 %v644
        %1087 = vmatpush.msra.mxu0 %v636
        %1088 = vmatpush.msra.mxu0 %v628
        %1089 = vmatpush.msra.mxu0 %v620
        %1090 = vmatpush.msra.mxu0 %v612
        %1091 = vmatpush.msra.mxu0 %v604
        %1092 = vmatpush.msra.mxu0 %v596
        %1093 = vmatpush.msra.mxu0 %v588
        %1094 = vmatmul.f32.gmra.mxu0 %v560
        %v1095 = vpop.f32.mrf.mxu0
        %v1096 = vadd.f32 0.0, %v1095
        %1097 = vdwg.mxu0
        %1098 = vmatpush.msra.mxu0 %v836
        %1099 = vmatpush.msra.mxu0 %v828
        %1100 = vmatpush.msra.mxu0 %v820
        %1101 = vmatpush.msra.mxu0 %v812
        %1102 = vmatpush.msra.mxu0 %v804
        %1103 = vmatpush.msra.mxu0 %v796
        %1104 = vmatpush.msra.mxu0 %v788
        %1105 = vmatpush.msra.mxu0 %v780
        %1106 = vmatpush.msra.mxu0 %v772
        %1107 = vmatpush.msra.mxu0 %v764
        %1108 = vmatpush.msra.mxu0 %v756
        %1109 = vmatpush.msra.mxu0 %v748
        %1110 = vmatpush.msra.mxu0 %v740
        %1111 = vmatpush.msra.mxu0 %v732
        %1112 = vmatpush.msra.mxu0 %v724
        %1113 = vmatpush.msra.mxu0 %v716
        %1114 = vmatmul.f32.gmra.mxu0 %v580
        %v1115 = vpop.f32.mrf.mxu0
        %v1116 = vadd.f32 %v1096, %v1115
        %1117 = vdwg.mxu0
        %1118 = vmatpush.msra.mxu0 %v709
        %1119 = vmatpush.msra.mxu0 %v701
        %1120 = vmatpush.msra.mxu0 %v693
        %1121 = vmatpush.msra.mxu0 %v685
        %1122 = vmatpush.msra.mxu0 %v677
        %1123 = vmatpush.msra.mxu0 %v669
        %1124 = vmatpush.msra.mxu0 %v661
        %1125 = vmatpush.msra.mxu0 %v653
        %1126 = vmatpush.msra.mxu0 %v645
        %1127 = vmatpush.msra.mxu0 %v637
        %1128 = vmatpush.msra.mxu0 %v629
        %1129 = vmatpush.msra.mxu0 %v621
        %1130 = vmatpush.msra.mxu0 %v613
        %1131 = vmatpush.msra.mxu0 %v605
        %1132 = vmatpush.msra.mxu0 %v597
        %1133 = vmatpush.msra.mxu0 %v589
        %1134 = vmatmul.f32.gmra.mxu0 %v560
        %v1135 = vpop.f32.mrf.mxu0
        %v1136 = vadd.f32 0.0, %v1135
        %1137 = vdwg.mxu0
        %1138 = vmatpush.msra.mxu0 %v837
        %1139 = vmatpush.msra.mxu0 %v829
        %1140 = vmatpush.msra.mxu0 %v821
        %1141 = vmatpush.msra.mxu0 %v813
        %1142 = vmatpush.msra.mxu0 %v805
        %1143 = vmatpush.msra.mxu0 %v797
        %1144 = vmatpush.msra.mxu0 %v789
        %1145 = vmatpush.msra.mxu0 %v781
        %1146 = vmatpush.msra.mxu0 %v773
        %1147 = vmatpush.msra.mxu0 %v765
        %1148 = vmatpush.msra.mxu0 %v757
        %1149 = vmatpush.msra.mxu0 %v749
        %1150 = vmatpush.msra.mxu0 %v741
        %1151 = vmatpush.msra.mxu0 %v733
        %1152 = vmatpush.msra.mxu0 %v725
        %1153 = vmatpush.msra.mxu0 %v717
        %1154 = vmatmul.f32.gmra.mxu0 %v580
        %v1155 = vpop.f32.mrf.mxu0
        %v1156 = vadd.f32 %v1136, %v1155
        %1157 = vdwg.mxu0
        %v1158 = vmax.f32 %v876, 0.0
        %v1159 = vmax.f32 %v916, 0.0
        %v1160 = vmax.f32 %v956, 0.0
        %v1161 = vmax.f32 %v996, 0.0
        %v1162 = vmax.f32 %v1036, 0.0
        %v1163 = vmax.f32 %v1076, 0.0
        %v1164 = vmax.f32 %v1116, 0.0
        %v1165 = vmax.f32 %v1156, 0.0
        %v1174 = vrot.slane %v1159, 4
        %v1175 = vrot.slane %v1161, 4
        %v1176 = vrot.slane %v1163, 4
        %v1177 = vrot.slane %v1165, 4
        %vm1178 = vcmask 1043456
        %v1179 = vsel %vm1178, %v1158, %v1174
        %v1180 = vsel %vm1178, %v1160, %v1175
        %v1181 = vsel %vm1178, %v1162, %v1176
        %v1182 = vsel %vm1178, %v1164, %v1177
        %1187 = vst [vmem:[%s295] sm:$0xff] %v1179
        %1188 = vst [vmem:[%s295 + $0x8] sm:$0xff] %v1180
        %1189 = vst [vmem:[%s295 + $0x10] sm:$0xff] %v1181
        %1190 = vst [vmem:[%s295 + $0x18] sm:$0xff] %v1182
        %p1191 = scmp.lt.s32.totalorder %s19, 1
        %s1192 = scalar_select %p1191, %s19, 1
        %s1193 = smul.addr %s1192, 8
        %s1194 = smul.addr %s1193, 4
        %s1195 = scalar_lea.vmem %s7, %s1194
        // Predicated region
        $region53: #{decoder_block_forward.1} parent=47 // pred_check
          %p1196 = pneg %p189
        $region54: #{decoder_block_forward.1} parent=47 // pred_check_branch
          %1198 = sbr.rel (%p1196) target = $region56
        $region55: #{decoder_block_forward.1} parent=47 // pred_region
          _
        $region56: #{decoder_block_forward.1} parent=47 // pred_fallthru
          _
      $region48: #{decoder_block_forward.1} parent=5 // pred_fallthru
        _
      %p1199 = scmp.le.s32.totalorder 2, %s14
      // Predicated region
      $region57: #{decoder_block_forward.1} parent=5 // pred_check
        %p1200 = pneg %p1199
      $region58: #{decoder_block_forward.1} parent=5 // pred_check_branch
        %1202 = sbr.rel (%p1200) target = $region60
      $region59: #{decoder_block_forward.1} parent=5 // pred_region
        %s1203 = ssub.s32 %s14, 2
        // Predicated region
        $region61: #{decoder_block_forward.1} parent=59 // pred_check
          %p1204 = pneg %p195
        $region62: #{decoder_block_forward.1} parent=59 // pred_check_branch
          %1206 = sbr.rel (%p1204) target = $region64
        $region63: #{decoder_block_forward.1} parent=59 // pred_region
          %p1207 = scmp.lt.s32.totalorder %s20, 1
          %s1208 = scalar_select %p1207, %s20, 1
          %s1209 = smul.addr %s1208, 8
          %s1210 = smul.addr %s1209, 4
          %s1211 = scalar_lea.vmem %s7, %s1210
        $region64: #{decoder_block_forward.1} parent=59 // pred_fallthru
          _
      $region60: #{decoder_block_forward.1} parent=5 // pred_fallthru
        _
    $region6: #{decoder_block_forward.1} parent=1 // loop_footer
      %s18 = sadd.s32 1, %s14
    $region7: #{decoder_block_forward.1} parent=1 // loop_footer_branch
      %13 = sbr.rel target = $region3
    $region8: #{decoder_block_forward.1} parent=1 // loop_exit
      _
    %1212 = vsyncpa [#allocation3], 1
    %s1213 = scalar_lea.sflag [#allocation3], 1
    %1214 = vsyncpa %s1213, 1

</llo_original>
